<compile_context>
chip_gen: v7x
topology: tpu7x:2x2x1
jax: 0.10.0
libtpu: 0.0.40
codegen_flags: <defaults>
</compile_context>

<pallas_src>
import functools

import jax
import jax.numpy as jnp
from jax.experimental import pallas as pl
from jax.experimental.pallas import tpu as pltpu


def _round_up(x: int, m: int) -> int:
    return (x + m - 1) // m * m


def mlp_kernel(x_ref, w0_ref, b0_ref, wh_ref, bh_ref, o_ref):
    # Embedding linear (no activation): bf16 operands, f32 accumulation on MXU.
    b0 = b0_ref[...]                                   # hoisted bias read [1, E] f32
    h = jnp.dot(x_ref[...], w0_ref[...],
                preferred_element_type=jnp.float32) + b0
    # Hidden layers: Linear + ReLU.  Layer count is static and small, so a
    # static Python loop is used; weights are read per layer from the resident
    # stack (for large layer counts move this to a grid axis / fori_loop).
    bh = bh_ref[...]                                   # hoisted [L-1, 1, E] f32
    n_hidden = wh_ref.shape[0]
    for l in range(n_hidden):
        w = wh_ref[l]                                  # [E, E] bf16
        h = jnp.dot(h.astype(w.dtype), w,
                    preferred_element_type=jnp.float32)
        h = jnp.maximum(h + bh[l], 0.0)                # bias + ReLU in f32
    o_ref[...] = h.astype(o_ref.dtype)


def _vmem_limit_bytes(tm, d_pad, e_pad, n_hidden):
    bf16, f32 = 2, 4
    resident_w = (d_pad * e_pad + n_hidden * e_pad * e_pad) * bf16
    resident_b = (n_hidden + 1) * e_pad * f32
    x_bufs = 2 * tm * d_pad * bf16            # double-buffered input tiles
    o_bufs = 2 * tm * e_pad * f32             # double-buffered output tiles
    live_h = 2 * tm * e_pad * f32             # in-flight activations
    budget = 2 * (resident_w + resident_b) + x_bufs + o_bufs + live_h + (4 << 20)
    # Stay safely under v7x's 64 MiB physical VMEM per TensorCore.
    return int(min(budget, 60 * 1024 * 1024))


@functools.partial(jax.jit, static_argnames=("tm",))
def mlp_pallas(x, w0, b0, wh, bh, *, tm=512):
    """x: [M, D_in]; w0: [D_in, E]; b0: [1, E]; wh: [L-1, E, E]; bh: [L-1, 1, E].

    Weights are stored as [D_in, D_out] (transpose of nn.Linear's weight).
    Requires layers >= 2 (i.e. at least one hidden Linear+ReLU block).
    """
    M, D_in = x.shape
    E = w0.shape[1]
    L1 = wh.shape[0]
    assert L1 >= 1, "mlp_pallas expects layers >= 2 (wh must have >= 1 layer)"

    # Lane-dense padding of the feature axes; row tile sized to the problem.
    d_pad = _round_up(D_in, 128)
    e_pad = _round_up(E, 128)
    tm_eff = min(tm, _round_up(M, 8))
    m_pad = _round_up(M, tm_eff)

    f32 = jnp.float32
    bf16 = jnp.bfloat16
    # Zero padding keeps the valid region numerically identical (padded lanes
    # of weights/biases are zero, so padded activations stay exactly zero).
    xp = jnp.zeros((m_pad, d_pad), bf16).at[:M, :D_in].set(x.astype(bf16))
    w0p = jnp.zeros((d_pad, e_pad), bf16).at[:D_in, :E].set(w0.astype(bf16))
    b0p = jnp.zeros((1, e_pad), f32).at[:, :E].set(b0.astype(f32))
    whp = jnp.zeros((L1, e_pad, e_pad), bf16).at[:, :E, :E].set(wh.astype(bf16))
    bhp = jnp.zeros((L1, 1, e_pad), f32).at[:, :, :E].set(bh.astype(f32))

    grid = (m_pad // tm_eff,)
    flops = 2 * m_pad * (d_pad * e_pad + L1 * e_pad * e_pad)
    bytes_accessed = (xp.size * 2 + w0p.size * 2 + whp.size * 2
                      + b0p.size * 4 + bhp.size * 4 + m_pad * e_pad * 4)

    out = pl.pallas_call(
        mlp_kernel,
        out_shape=jax.ShapeDtypeStruct((m_pad, e_pad), jnp.float32),
        grid_spec=pltpu.PrefetchScalarGridSpec(
            num_scalar_prefetch=0,
            grid=grid,
            in_specs=[
                # x: streamed / double-buffered over the M grid axis.
                pl.BlockSpec((tm_eff, d_pad), lambda i: (i, 0)),
                # Weights and biases: resident across all grid steps.
                pl.BlockSpec((d_pad, e_pad), lambda i: (0, 0)),
                pl.BlockSpec((1, e_pad), lambda i: (0, 0)),
                pl.BlockSpec((L1, e_pad, e_pad), lambda i: (0, 0, 0)),
                pl.BlockSpec((L1, 1, e_pad), lambda i: (0, 0, 0)),
            ],
            out_specs=pl.BlockSpec((tm_eff, e_pad), lambda i: (i, 0)),
        ),
        compiler_params=pltpu.CompilerParams(
            dimension_semantics=("parallel",),
            vmem_limit_bytes=_vmem_limit_bytes(tm_eff, d_pad, e_pad, L1),
        ),
        cost_estimate=pl.CostEstimate(
            flops=flops, transcendentals=0, bytes_accessed=bytes_accessed),
    )(xp, w0p, b0p, whp, bhp)

    # Slice the valid region back out of the padded output.
    return out[:M, :E]


def mlp_reference(x, w0, b0, wh, bh):
    h = x @ w0 + b0
    for l in range(wh.shape[0]):
        h = jnp.maximum(h @ wh[l] + bh[l], 0.0)
    return h


if __name__ == "__main__":
    # Small shapes consistent with the module's forward.
    batch, seq = 2, 8
    input_dim = 8
    embedding_dim = 32
    layers = 3  # => 1 embedding linear + 2 (linear + ReLU) blocks

    key = jax.random.PRNGKey(0)
    k_x, k_w0, k_b0, k_wh, k_bh = jax.random.split(key, 5)

    M = batch * seq
    x = jax.random.normal(k_x, (M, input_dim), dtype=jnp.float32)

    # Deterministic synthetic parameters (nn.Linear shapes, stored transposed).
    w0 = jax.random.normal(k_w0, (input_dim, embedding_dim), dtype=jnp.float32) * 0.1
    b0 = jax.random.normal(k_b0, (1, embedding_dim), dtype=jnp.float32) * 0.1
    wh = jax.random.normal(k_wh, (layers - 1, embedding_dim, embedding_dim),
                           dtype=jnp.float32) * 0.1
    bh = jax.random.normal(k_bh, (layers - 1, 1, embedding_dim),
                           dtype=jnp.float32) * 0.1

    out = mlp_pallas(x, w0, b0, wh, bh)
    out = jax.block_until_ready(out)

    ref = mlp_reference(x, w0, b0, wh, bh)
    assert out.shape == (M, embedding_dim)
    # bf16 matmul operands with f32 accumulation -> relaxed tolerance vs f32 ref.
    assert jnp.allclose(out, ref, atol=5e-2, rtol=5e-2), \
        float(jnp.max(jnp.abs(out - ref)))

    print("KERNEL_OK")
</pallas_src>

<mosaic_0001>
module attributes {stable_mosaic.version = 11 : i64} {
  func.func @mlp_kernel(%arg0: i32, %arg1: memref<16x128xbf16, #tpu.memory_space<vmem>>, %arg2: memref<128x128xbf16, #tpu.memory_space<vmem>>, %arg3: memref<1x128xf32, #tpu.memory_space<vmem>>, %arg4: memref<2x128x128xbf16, #tpu.memory_space<vmem>>, %arg5: memref<2x1x128xf32, #tpu.memory_space<vmem>>, %arg6: memref<16x128xf32, #tpu.memory_space<vmem>>) attributes {dimension_semantics = [#tpu.dimension_semantics<parallel>], iteration_bounds = array<i64: 1>, scalar_prefetch = 0 : i64, scratch_operands = 0 : i64, tpu.core_type = #tpu.core_type<tc>, window_params = [{transform_indices = @transform_0, window_bounds = array<i64: 16, 128>}, {pipeline_mode = #tpu.pipeline_mode<synchronous>, transform_indices = @transform_1, window_bounds = array<i64: 128, 128>}, {pipeline_mode = #tpu.pipeline_mode<synchronous>, transform_indices = @transform_2, window_bounds = array<i64: 1, 128>}, {pipeline_mode = #tpu.pipeline_mode<synchronous>, transform_indices = @transform_3, window_bounds = array<i64: 2, 128, 128>}, {pipeline_mode = #tpu.pipeline_mode<synchronous>, transform_indices = @transform_4, window_bounds = array<i64: 2, 1, 128>}, {transform_indices = @transform_5, window_bounds = array<i64: 16, 128>}]} {
    %c0 = arith.constant 0 : index
    %c0_0 = arith.constant 0 : index
    %0 = vector.load %arg3[%c0, %c0_0] : memref<1x128xf32, #tpu.memory_space<vmem>>, vector<1x128xf32>
    %c0_1 = arith.constant 0 : index
    %c0_2 = arith.constant 0 : index
    %1 = vector.load %arg1[%c0_1, %c0_2] : memref<16x128xbf16, #tpu.memory_space<vmem>>, vector<16x128xbf16>
    %c0_3 = arith.constant 0 : index
    %c0_4 = arith.constant 0 : index
    %2 = vector.load %arg2[%c0_3, %c0_4] : memref<128x128xbf16, #tpu.memory_space<vmem>>, vector<128x128xbf16>
    %cst = arith.constant dense<0.000000e+00> : vector<16x128xf32>
    %3 = tpu.matmul %1, %2, %cst {dimension_numbers = #tpu.dot_dimension_numbers<[1], [0], [0], [1], [0, 0, 1, 1], [], []>} : vector<16x128xbf16>, vector<128x128xbf16>, vector<16x128xf32> -> vector<16x128xf32>
    %4 = vector.broadcast %0 : vector<1x128xf32> to vector<16x128xf32>
    %5 = arith.addf %3, %4 : vector<16x128xf32>
    %c0_5 = arith.constant 0 : index
    %c0_6 = arith.constant 0 : index
    %c0_7 = arith.constant 0 : index
    %6 = vector.load %arg5[%c0_5, %c0_6, %c0_7] : memref<2x1x128xf32, #tpu.memory_space<vmem>>, vector<2x1x128xf32>
    %c0_8 = arith.constant 0 : index
    %c0_9 = arith.constant 0 : index
    %c0_10 = arith.constant 0 : index
    %7 = vector.load %arg4[%c0_8, %c0_9, %c0_10] : memref<2x128x128xbf16, #tpu.memory_space<vmem>>, vector<1x128x128xbf16>
    %8 = vector.shape_cast %7 : vector<1x128x128xbf16> to vector<128x128xbf16>
    %9 = arith.truncf %5 : vector<16x128xf32> to vector<16x128xbf16>
    %cst_11 = arith.constant dense<0.000000e+00> : vector<16x128xf32>
    %10 = tpu.matmul %9, %8, %cst_11 {dimension_numbers = #tpu.dot_dimension_numbers<[1], [0], [0], [1], [0, 0, 1, 1], [], []>} : vector<16x128xbf16>, vector<128x128xbf16>, vector<16x128xf32> -> vector<16x128xf32>
    %11 = vector.extract_strided_slice %6 {offsets = [0, 0, 0], sizes = [1, 1, 128], strides = [1, 1, 1]} : vector<2x1x128xf32> to vector<1x1x128xf32>
    %12 = vector.shape_cast %11 : vector<1x1x128xf32> to vector<1x128xf32>
    %13 = vector.broadcast %12 : vector<1x128xf32> to vector<16x128xf32>
    %14 = arith.addf %10, %13 : vector<16x128xf32>
    %cst_12 = arith.constant 0.000000e+00 : f32
    %15 = vector.broadcast %cst_12 : f32 to vector<16x128xf32>
    %16 = arith.maximumf %14, %15 : vector<16x128xf32>
    %c1 = arith.constant 1 : index
    %c0_13 = arith.constant 0 : index
    %c0_14 = arith.constant 0 : index
    %17 = vector.load %arg4[%c1, %c0_13, %c0_14] : memref<2x128x128xbf16, #tpu.memory_space<vmem>>, vector<1x128x128xbf16>
    %18 = vector.shape_cast %17 : vector<1x128x128xbf16> to vector<128x128xbf16>
    %19 = arith.truncf %16 : vector<16x128xf32> to vector<16x128xbf16>
    %cst_15 = arith.constant dense<0.000000e+00> : vector<16x128xf32>
    %20 = tpu.matmul %19, %18, %cst_15 {dimension_numbers = #tpu.dot_dimension_numbers<[1], [0], [0], [1], [0, 0, 1, 1], [], []>} : vector<16x128xbf16>, vector<128x128xbf16>, vector<16x128xf32> -> vector<16x128xf32>
    %21 = vector.extract_strided_slice %6 {offsets = [1, 0, 0], sizes = [1, 1, 128], strides = [1, 1, 1]} : vector<2x1x128xf32> to vector<1x1x128xf32>
    %22 = vector.shape_cast %21 : vector<1x1x128xf32> to vector<1x128xf32>
    %23 = vector.broadcast %22 : vector<1x128xf32> to vector<16x128xf32>
    %24 = arith.addf %20, %23 : vector<16x128xf32>
    %cst_16 = arith.constant 0.000000e+00 : f32
    %25 = vector.broadcast %cst_16 : f32 to vector<16x128xf32>
    %26 = arith.maximumf %24, %25 : vector<16x128xf32>
    %c0_17 = arith.constant 0 : index
    %c0_18 = arith.constant 0 : index
    %27 = vector.load %arg6[%c0_17, %c0_18] : memref<16x128xf32, #tpu.memory_space<vmem>>, vector<16x128xf32>
    tpu.vector_store %arg6[%c0_17, %c0_18], %26 {strides = array<i32>} : memref<16x128xf32, #tpu.memory_space<vmem>>, vector<16x128xf32>,
    return
  }
  func.func @transform_0(%arg0: i32) -> (i32, i32) {
    %c0_i32 = arith.constant 0 : i32
    %c0_i32_0 = arith.constant 0 : i32
    return %arg0, %c0_i32 : i32, i32
  }
  func.func @transform_1(%arg0: i32) -> (i32, i32) {
    %c0_i32 = arith.constant 0 : i32
    %c0_i32_0 = arith.constant 0 : i32
    %c0_i32_1 = arith.constant 0 : i32
    return %c0_i32, %c0_i32_0 : i32, i32
  }
  func.func @transform_2(%arg0: i32) -> (i32, i32) {
    %c0_i32 = arith.constant 0 : i32
    %c0_i32_0 = arith.constant 0 : i32
    %c0_i32_1 = arith.constant 0 : i32
    return %c0_i32, %c0_i32_0 : i32, i32
  }
  func.func @transform_3(%arg0: i32) -> (i32, i32, i32) {
    %c0_i32 = arith.constant 0 : i32
    %c0_i32_0 = arith.constant 0 : i32
    %c0_i32_1 = arith.constant 0 : i32
    %c0_i32_2 = arith.constant 0 : i32
    return %c0_i32, %c0_i32_0, %c0_i32_1 : i32, i32, i32
  }
  func.func @transform_4(%arg0: i32) -> (i32, i32, i32) {
    %c0_i32 = arith.constant 0 : i32
    %c0_i32_0 = arith.constant 0 : i32
    %c0_i32_1 = arith.constant 0 : i32
    %c0_i32_2 = arith.constant 0 : i32
    return %c0_i32, %c0_i32_0, %c0_i32_1 : i32, i32, i32
  }
  func.func @transform_5(%arg0: i32) -> (i32, i32) {
    %c0_i32 = arith.constant 0 : i32
    %c0_i32_0 = arith.constant 0 : i32
    return %arg0, %c0_i32 : i32, i32
  }
}

</mosaic_0001>

<llo_original>
// kernel: mlp_pallas.1
$region0: #{mlp_pallas.1}
  #allocation0 [shape = 'u32[]', space=smem, size = 0x4, offset = 0x4, fixed_abs, tag = 'smem constant byte address 0x4 - core index']
  #allocation1 [shape = 'u32[144,128]{1,0:T(1,128)}', space=vmem, size = 0x12000, scoped, tag = 'internal scratch']
  %s0 = inlined_call_operand.vmem [shape: bf16[16,128], index: 0, kind: input, shape index: {}]
  %s1 = inlined_call_operand.vmem [shape: bf16[128,128], index: 1, kind: input, shape index: {}]
  %s2 = inlined_call_operand.vmem [shape: f32[1,128], index: 2, kind: input, shape index: {}]
  %s3 = inlined_call_operand.vmem [shape: bf16[2,128,128], index: 3, kind: input, shape index: {}]
  %s4 = inlined_call_operand.vmem [shape: f32[2,1,128], index: 4, kind: input, shape index: {}]
  %s5 = inlined_call_operand.hbm [shape: f32[16,128], index: 5, kind: output, shape index: {}]
  %s6 = sld [smem:[#allocation0]]
  $region30: #{mlp_pallas.1} parent=0
    _
  %s8 = ssub.s32 1, %s6
  %s9 = scalar_select 0, %s8, %s6
  $region1: #{mlp_pallas.1} parent=0
    #allocation2 [shape = 'u8[8192]{0}', space=vmem, size = 0x2000, scoped, tag = 'output window, operand 0, single buffered']
    #allocation3 [shape = 's32[1]{0}', space=sflag, size = 0x4, scoped, tag = 'scoped memory for mlp_pallas.1']
    %10 = vsyncpa [#allocation3], 0
    // Predicated region
    $region2: #{mlp_pallas.1} parent=1 // pred_check
      _
    $region3: #{mlp_pallas.1} parent=1 // pred_check_branch
      %12 = sbr.rel (0) target = $region5
    $region4: #{mlp_pallas.1} parent=1 // pred_region
      _
    $region5: #{mlp_pallas.1} parent=1 // pred_fallthru
      _
    // Predicated region
    $region6: #{mlp_pallas.1} parent=1 // pred_check
      _
    $region7: #{mlp_pallas.1} parent=1 // pred_check_branch
      %14 = sbr.rel (0) target = $region9
    $region8: #{mlp_pallas.1} parent=1 // pred_region
      _
    $region9: #{mlp_pallas.1} parent=1 // pred_fallthru
      _
    // Predicated region
    $region10: #{mlp_pallas.1} parent=1 // pred_check
      _
    $region11: #{mlp_pallas.1} parent=1 // pred_check_branch
      %16 = sbr.rel (0) target = $region13
    $region12: #{mlp_pallas.1} parent=1 // pred_region
      _
    $region13: #{mlp_pallas.1} parent=1 // pred_fallthru
      _
    // Predicated region
    $region14: #{mlp_pallas.1} parent=1 // pred_check
      _
    $region15: #{mlp_pallas.1} parent=1 // pred_check_branch
      %18 = sbr.rel (0) target = $region17
    $region16: #{mlp_pallas.1} parent=1 // pred_region
      _
    $region17: #{mlp_pallas.1} parent=1 // pred_fallthru
      _
    // Predicated region
    $region18: #{mlp_pallas.1} parent=1 // pred_check
      _
    $region19: #{mlp_pallas.1} parent=1 // pred_check_branch
      %20 = sbr.rel (0) target = $region21
    $region20: #{mlp_pallas.1} parent=1 // pred_region
      _
    $region21: #{mlp_pallas.1} parent=1 // pred_fallthru
      _
    %v22 = vld [vmem:[%s2] sm:$0x1]
    %v23 = vld [vmem:[%s0] sm:$0xf]
    %v24 = vld [vmem:[%s0 + $0x4] sm:$0xf]
    %v25 = vld [vmem:[%s1] sm:$0xf]
    %v26 = vld [vmem:[%s1 + $0x4] sm:$0xf]
    %v27 = vld [vmem:[%s1 + $0x8] sm:$0xf]
    %v28 = vld [vmem:[%s1 + $0xc] sm:$0xf]
    %v29 = vld [vmem:[%s1 + $0x10] sm:$0xf]
    %v30 = vld [vmem:[%s1 + $0x14] sm:$0xf]
    %v31 = vld [vmem:[%s1 + $0x18] sm:$0xf]
    %v32 = vld [vmem:[%s1 + $0x1c] sm:$0xf]
    %v33 = vld [vmem:[%s1 + $0x20] sm:$0xf]
    %v34 = vld [vmem:[%s1 + $0x24] sm:$0xf]
    %v35 = vld [vmem:[%s1 + $0x28] sm:$0xf]
    %v36 = vld [vmem:[%s1 + $0x2c] sm:$0xf]
    %v37 = vld [vmem:[%s1 + $0x30] sm:$0xf]
    %v38 = vld [vmem:[%s1 + $0x34] sm:$0xf]
    %v39 = vld [vmem:[%s1 + $0x38] sm:$0xf]
    %v40 = vld [vmem:[%s1 + $0x3c] sm:$0xf]
    %v42 = vlaneseq
    %v43 = vshrl.u32 %v42, 7
    %v44 = vsub.s32 0, %v43
    %v45 = vrot.slane %v22, %v44
    %v49 = vunpack.c.l.b16 %v23
    %v50 = vunpack.c.l.b16 %v24
    %v51 = vpack.c.b16 %v50, %v49
    %v69 = vunpack.c.l.b16 %v25
    %v70 = vunpack.c.l.b16 %v26
    %v71 = vunpack.c.l.b16 %v27
    %v72 = vunpack.c.l.b16 %v28
    %v73 = vunpack.c.l.b16 %v29
    %v74 = vunpack.c.l.b16 %v30
    %v75 = vunpack.c.l.b16 %v31
    %v76 = vunpack.c.l.b16 %v32
    %v77 = vunpack.c.l.b16 %v33
    %v78 = vunpack.c.l.b16 %v34
    %v79 = vunpack.c.l.b16 %v35
    %v80 = vunpack.c.l.b16 %v36
    %v81 = vunpack.c.l.b16 %v37
    %v82 = vunpack.c.l.b16 %v38
    %v83 = vunpack.c.l.b16 %v39
    %v84 = vunpack.c.l.b16 %v40
    %v85 = vpack.c.b16 %v70, %v69
    %v86 = vpack.c.b16 %v72, %v71
    %v87 = vpack.c.b16 %v74, %v73
    %v88 = vpack.c.b16 %v76, %v75
    %v89 = vpack.c.b16 %v78, %v77
    %v90 = vpack.c.b16 %v80, %v79
    %v91 = vpack.c.b16 %v82, %v81
    %v92 = vpack.c.b16 %v84, %v83
    %101 = vmatprep.subr.bf16.mxu0 0
    %102 = vmatpush1.bf16.msra.mxu0 %v85
    %103 = vmatprep.subr.bf16.mxu0 0
    %104 = vmatpush1.bf16.msra.mxu0 %v86
    %105 = vmatprep.subr.bf16.mxu0 0
    %106 = vmatpush1.bf16.msra.mxu0 %v87
    %107 = vmatprep.subr.bf16.mxu0 0
    %108 = vmatpush1.bf16.msra.mxu0 %v88
    %109 = vmatprep.subr.bf16.mxu0 0
    %110 = vmatpush1.bf16.msra.mxu0 %v89
    %111 = vmatprep.subr.bf16.mxu0 0
    %112 = vmatpush1.bf16.msra.mxu0 %v90
    %113 = vmatprep.subr.bf16.mxu0 0
    %114 = vmatpush1.bf16.msra.mxu0 %v91
    %115 = vmatprep.subr.bf16.mxu0 0
    %116 = vmatpush1.bf16.msra.mxu0 %v92
    %117 = vmatprep.subr.bf16.mxu0 0
    %118 = vmatpush1.bf16.msra.mxu0 0
    %119 = vmatprep.subr.bf16.mxu0 0
    %120 = vmatpush1.bf16.msra.mxu0 0
    %121 = vmatprep.subr.bf16.mxu0 0
    %122 = vmatpush1.bf16.msra.mxu0 0
    %123 = vmatprep.subr.bf16.mxu0 0
    %124 = vmatpush1.bf16.msra.mxu0 0
    %125 = vmatprep.subr.bf16.mxu0 0
    %126 = vmatpush1.bf16.msra.mxu0 0
    %127 = vmatprep.subr.bf16.mxu0 0
    %128 = vmatpush1.bf16.msra.mxu0 0
    %129 = vmatprep.subr.bf16.mxu0 0
    %130 = vmatpush1.bf16.msra.mxu0 0
    %131 = vmatprep.subr.bf16.mxu0 0
    %132 = vmatpush1.bf16.msra.mxu0 0
    %133 = vmatprep.mubr.bf16.mxu0 0
    %134 = vmatmul.mubr.bf16.gmra.mrb[0].mxu0 %v51
    %v135 = vpop.f32.mrb[0].mxu0
    %v136 = vadd.f32 %v45, %v135
    %v137 = vpop.f32.mrb[0].mxu0
    %v138 = vpop.f32.mrb[0].mxu0
    %v139 = vadd.f32 %v45, %v138
    %v140 = vpop.f32.mrb[0].mxu0
    %141 = vdwg.mxu0
    %v142 = vld [vmem:[%s4] sm:$0x1]
    %v143 = vld [vmem:[%s4 + $0x1] sm:$0x1]
    %v144 = vld [vmem:[%s3] sm:$0xf]
    %v145 = vld [vmem:[%s3 + $0x4] sm:$0xf]
    %v146 = vld [vmem:[%s3 + $0x8] sm:$0xf]
    %v147 = vld [vmem:[%s3 + $0xc] sm:$0xf]
    %v148 = vld [vmem:[%s3 + $0x10] sm:$0xf]
    %v149 = vld [vmem:[%s3 + $0x14] sm:$0xf]
    %v150 = vld [vmem:[%s3 + $0x18] sm:$0xf]
    %v151 = vld [vmem:[%s3 + $0x1c] sm:$0xf]
    %v152 = vld [vmem:[%s3 + $0x20] sm:$0xf]
    %v153 = vld [vmem:[%s3 + $0x24] sm:$0xf]
    %v154 = vld [vmem:[%s3 + $0x28] sm:$0xf]
    %v155 = vld [vmem:[%s3 + $0x2c] sm:$0xf]
    %v156 = vld [vmem:[%s3 + $0x30] sm:$0xf]
    %v157 = vld [vmem:[%s3 + $0x34] sm:$0xf]
    %v158 = vld [vmem:[%s3 + $0x38] sm:$0xf]
    %v159 = vld [vmem:[%s3 + $0x3c] sm:$0xf]
    %v160 = vpack.c.bf16 %v139, %v136
    %v162 = vlaneseq
    %v163 = vshrl.u32 %v162, 7
    %v164 = vsub.s32 0, %v163
    %v165 = vrot.slane %v142, %v164
    %v183 = vunpack.c.l.b16 %v144
    %v184 = vunpack.c.l.b16 %v145
    %v185 = vunpack.c.l.b16 %v146
    %v186 = vunpack.c.l.b16 %v147
    %v187 = vunpack.c.l.b16 %v148
    %v188 = vunpack.c.l.b16 %v149
    %v189 = vunpack.c.l.b16 %v150
    %v190 = vunpack.c.l.b16 %v151
    %v191 = vunpack.c.l.b16 %v152
    %v192 = vunpack.c.l.b16 %v153
    %v193 = vunpack.c.l.b16 %v154
    %v194 = vunpack.c.l.b16 %v155
    %v195 = vunpack.c.l.b16 %v156
    %v196 = vunpack.c.l.b16 %v157
    %v197 = vunpack.c.l.b16 %v158
    %v198 = vunpack.c.l.b16 %v159
    %v199 = vpack.c.b16 %v184, %v183
    %v200 = vpack.c.b16 %v186, %v185
    %v201 = vpack.c.b16 %v188, %v187
    %v202 = vpack.c.b16 %v190, %v189
    %v203 = vpack.c.b16 %v192, %v191
    %v204 = vpack.c.b16 %v194, %v193
    %v205 = vpack.c.b16 %v196, %v195
    %v206 = vpack.c.b16 %v198, %v197
    %215 = vmatprep.subr.bf16.mxu0 0
    %216 = vmatpush1.bf16.msra.mxu0 %v199
    %217 = vmatprep.subr.bf16.mxu0 0
    %218 = vmatpush1.bf16.msra.mxu0 %v200
    %219 = vmatprep.subr.bf16.mxu0 0
    %220 = vmatpush1.bf16.msra.mxu0 %v201
    %221 = vmatprep.subr.bf16.mxu0 0
    %222 = vmatpush1.bf16.msra.mxu0 %v202
    %223 = vmatprep.subr.bf16.mxu0 0
    %224 = vmatpush1.bf16.msra.mxu0 %v203
    %225 = vmatprep.subr.bf16.mxu0 0
    %226 = vmatpush1.bf16.msra.mxu0 %v204
    %227 = vmatprep.subr.bf16.mxu0 0
    %228 = vmatpush1.bf16.msra.mxu0 %v205
    %229 = vmatprep.subr.bf16.mxu0 0
    %230 = vmatpush1.bf16.msra.mxu0 %v206
    %231 = vmatprep.subr.bf16.mxu0 0
    %232 = vmatpush1.bf16.msra.mxu0 0
    %233 = vmatprep.subr.bf16.mxu0 0
    %234 = vmatpush1.bf16.msra.mxu0 0
    %235 = vmatprep.subr.bf16.mxu0 0
    %236 = vmatpush1.bf16.msra.mxu0 0
    %237 = vmatprep.subr.bf16.mxu0 0
    %238 = vmatpush1.bf16.msra.mxu0 0
    %239 = vmatprep.subr.bf16.mxu0 0
    %240 = vmatpush1.bf16.msra.mxu0 0
    %241 = vmatprep.subr.bf16.mxu0 0
    %242 = vmatpush1.bf16.msra.mxu0 0
    %243 = vmatprep.subr.bf16.mxu0 0
    %244 = vmatpush1.bf16.msra.mxu0 0
    %245 = vmatprep.subr.bf16.mxu0 0
    %246 = vmatpush1.bf16.msra.mxu0 0
    %247 = vmatprep.mubr.bf16.mxu0 0
    %248 = vmatmul.mubr.bf16.gmra.mrb[0].mxu0 %v160
    %v249 = vpop.f32.mrb[0].mxu0
    %v250 = vadd.f32 %v165, %v249
    %v251 = vpop.f32.mrb[0].mxu0
    %v252 = vpop.f32.mrb[0].mxu0
    %v253 = vadd.f32 %v165, %v252
    %v254 = vpop.f32.mrb[0].mxu0
    %255 = vdwg.mxu0
    %v256 = vmax.f32 %v250, 0.0
    %v257 = vmax.f32 %v253, 0.0
    %s258 = scalar_lea.vmem %s3, 64
    %v259 = vld [vmem:[%s258] sm:$0xf]
    %v260 = vld [vmem:[%s258 + $0x4] sm:$0xf]
    %v261 = vld [vmem:[%s258 + $0x8] sm:$0xf]
    %v262 = vld [vmem:[%s258 + $0xc] sm:$0xf]
    %v263 = vld [vmem:[%s258 + $0x10] sm:$0xf]
    %v264 = vld [vmem:[%s258 + $0x14] sm:$0xf]
    %v265 = vld [vmem:[%s258 + $0x18] sm:$0xf]
    %v266 = vld [vmem:[%s258 + $0x1c] sm:$0xf]
    %v267 = vld [vmem:[%s258 + $0x20] sm:$0xf]
    %v268 = vld [vmem:[%s258 + $0x24] sm:$0xf]
    %v269 = vld [vmem:[%s258 + $0x28] sm:$0xf]
    %v270 = vld [vmem:[%s258 + $0x2c] sm:$0xf]
    %v271 = vld [vmem:[%s258 + $0x30] sm:$0xf]
    %v272 = vld [vmem:[%s258 + $0x34] sm:$0xf]
    %v273 = vld [vmem:[%s258 + $0x38] sm:$0xf]
    %v274 = vld [vmem:[%s258 + $0x3c] sm:$0xf]
    %v275 = vpack.c.bf16 %v257, %v256
    %v277 = vlaneseq
    %v278 = vshrl.u32 %v277, 7
    %v279 = vsub.s32 0, %v278
    %v280 = vrot.slane %v143, %v279
    %v298 = vunpack.c.l.b16 %v259
    %v299 = vunpack.c.l.b16 %v260
    %v300 = vunpack.c.l.b16 %v261
    %v301 = vunpack.c.l.b16 %v262
    %v302 = vunpack.c.l.b16 %v263
    %v303 = vunpack.c.l.b16 %v264
    %v304 = vunpack.c.l.b16 %v265
    %v305 = vunpack.c.l.b16 %v266
    %v306 = vunpack.c.l.b16 %v267
    %v307 = vunpack.c.l.b16 %v268
    %v308 = vunpack.c.l.b16 %v269
    %v309 = vunpack.c.l.b16 %v270
    %v310 = vunpack.c.l.b16 %v271
    %v311 = vunpack.c.l.b16 %v272
    %v312 = vunpack.c.l.b16 %v273
    %v313 = vunpack.c.l.b16 %v274
    %v314 = vpack.c.b16 %v299, %v298
    %v315 = vpack.c.b16 %v301, %v300
    %v316 = vpack.c.b16 %v303, %v302
    %v317 = vpack.c.b16 %v305, %v304
    %v318 = vpack.c.b16 %v307, %v306
    %v319 = vpack.c.b16 %v309, %v308
    %v320 = vpack.c.b16 %v311, %v310
    %v321 = vpack.c.b16 %v313, %v312
    %330 = vmatprep.subr.bf16.mxu0 0
    %331 = vmatpush1.bf16.msra.mxu0 %v314
    %332 = vmatprep.subr.bf16.mxu0 0
    %333 = vmatpush1.bf16.msra.mxu0 %v315
    %334 = vmatprep.subr.bf16.mxu0 0
    %335 = vmatpush1.bf16.msra.mxu0 %v316
    %336 = vmatprep.subr.bf16.mxu0 0
    %337 = vmatpush1.bf16.msra.mxu0 %v317
    %338 = vmatprep.subr.bf16.mxu0 0
    %339 = vmatpush1.bf16.msra.mxu0 %v318
    %340 = vmatprep.subr.bf16.mxu0 0
    %341 = vmatpush1.bf16.msra.mxu0 %v319
    %342 = vmatprep.subr.bf16.mxu0 0
    %343 = vmatpush1.bf16.msra.mxu0 %v320
    %344 = vmatprep.subr.bf16.mxu0 0
    %345 = vmatpush1.bf16.msra.mxu0 %v321
    %346 = vmatprep.subr.bf16.mxu0 0
    %347 = vmatpush1.bf16.msra.mxu0 0
    %348 = vmatprep.subr.bf16.mxu0 0
    %349 = vmatpush1.bf16.msra.mxu0 0
    %350 = vmatprep.subr.bf16.mxu0 0
    %351 = vmatpush1.bf16.msra.mxu0 0
    %352 = vmatprep.subr.bf16.mxu0 0
    %353 = vmatpush1.bf16.msra.mxu0 0
    %354 = vmatprep.subr.bf16.mxu0 0
    %355 = vmatpush1.bf16.msra.mxu0 0
    %356 = vmatprep.subr.bf16.mxu0 0
    %357 = vmatpush1.bf16.msra.mxu0 0
    %358 = vmatprep.subr.bf16.mxu0 0
    %359 = vmatpush1.bf16.msra.mxu0 0
    %360 = vmatprep.subr.bf16.mxu0 0
    %361 = vmatpush1.bf16.msra.mxu0 0
    %362 = vmatprep.mubr.bf16.mxu0 0
    %363 = vmatmul.mubr.bf16.gmra.mrb[0].mxu0 %v275
    %v364 = vpop.f32.mrb[0].mxu0
    %v365 = vadd.f32 %v280, %v364
    %v366 = vpop.f32.mrb[0].mxu0
    %v367 = vpop.f32.mrb[0].mxu0
    %v368 = vadd.f32 %v280, %v367
    %v369 = vpop.f32.mrb[0].mxu0
    %370 = vdwg.mxu0
    %v371 = vmax.f32 %v365, 0.0
    %v372 = vmax.f32 %v368, 0.0
    %373 = vst [vmem:[#allocation2] sm:$0xff] %v371
    %374 = vst [vmem:[#allocation2 + $0x8] sm:$0xff] %v372
    // Predicated region
    $region22: #{mlp_pallas.1} parent=1 // pred_check
      _
    $region23: #{mlp_pallas.1} parent=1 // pred_check_branch
      %376 = sbr.rel (0) target = $region25
    $region24: #{mlp_pallas.1} parent=1 // pred_region
      %s378 = ssub.s32 256, 256
      %379 = vsyncadd [#allocation3], %s378
      %s380 = sshll.u32 [#allocation2], 4
      %s381 = int_to_ptr.vmem [resolvable:$true] %s380
      %386 = dma.vmem_to_hbm [thread:$0]  %s381, 256, %s5, [#allocation3], 128, 128, 8
    $region25: #{mlp_pallas.1} parent=1 // pred_fallthru
      _
    // Predicated region
    $region26: #{mlp_pallas.1} parent=1 // pred_check
      _
    $region27: #{mlp_pallas.1} parent=1 // pred_check_branch
      %388 = sbr.rel (0) target = $region29
    $region28: #{mlp_pallas.1} parent=1 // pred_region
      %389 = dma.done [#allocation3], 256
    $region29: #{mlp_pallas.1} parent=1 // pred_fallthru
      _
    %390 = vsyncpa [#allocation3], 1

</llo_original>
